<compile_context>
chip_gen: v5e
topology: v5e:2x2
jax: 0.10.0
libtpu: 0.0.40
codegen_flags: <defaults>
</compile_context>

<pallas_src>
import functools

import jax
import jax.numpy as jnp
from jax import lax
from jax.experimental import pallas as pl
from jax.experimental.pallas import tpu as pltpu


LANES = 128           # lane width of the flattened slab (vreg lane count)
ACC_ROWS = 8          # (8, 128) f32 accumulator block = exactly one vreg
MAX_TILE_ROWS = 8192  # 8192*128*4B = 4 MiB per f32 input tile per grid step


def _recon_loss_kernel(f_ref, t_ref, acc_ref, *, valid_rows, tile_rows):
    """grid = (num_tiles,) over the row axis (reduction, "arbitrary").

    f_ref, t_ref : (tile_rows, LANES) input tiles in VMEM (native dtype)
    acc_ref      : (ACC_ROWS, LANES) f32 output block, VMEM-resident across
                   the whole grid (constant index map), written back once.
    """
    i = pl.program_id(0)

    @pl.when(i == 0)
    def _():
        acc_ref[...] = jnp.zeros_like(acc_ref)

    diff = t_ref[...].astype(jnp.float32) - f_ref[...].astype(jnp.float32)
    vals = jnp.log(jnp.abs(diff) + 0.5)

    def accumulate(v):
        # Fold (tile_rows, LANES) -> (ACC_ROWS, LANES): pure vreg adds
        # (leading-dim reshape keeps the (8,128) tiles intact; no XLU).
        acc_ref[...] += v.reshape(tile_rows // ACC_ROWS, ACC_ROWS, LANES).sum(axis=0)

    if valid_rows % tile_rows == 0:
        accumulate(vals)
    else:
        last = pl.num_programs(0) - 1

        @pl.when(i < last)
        def _():
            accumulate(vals)

        @pl.when(i == last)
        def _():
            # The final block extends past the array; Pallas pads it with
            # unspecified values — mask those rows out before accumulating.
            rid = lax.broadcasted_iota(jnp.int32, (tile_rows, LANES), 0) + i * tile_rows
            accumulate(jnp.where(rid < valid_rows, vals, 0.0))


def _recon_loss_bulk(f2, t2, rows, tile_rows):
    """Sum of log(|t - f| + 0.5) over a (rows, LANES) slab via Pallas."""
    grid = pl.cdiv(rows, tile_rows)
    kernel = functools.partial(_recon_loss_kernel, valid_rows=rows, tile_rows=tile_rows)
    acc = pl.pallas_call(
        kernel,
        out_shape=jax.ShapeDtypeStruct((ACC_ROWS, LANES), jnp.float32),
        grid_spec=pltpu.PrefetchScalarGridSpec(
            num_scalar_prefetch=0,
            grid=(grid,),
            in_specs=[
                pl.BlockSpec((tile_rows, LANES), lambda i: (i, 0)),
                pl.BlockSpec((tile_rows, LANES), lambda i: (i, 0)),
            ],
            out_specs=pl.BlockSpec((ACC_ROWS, LANES), lambda i: (0, 0)),
        ),
        compiler_params=pltpu.CompilerParams(
            dimension_semantics=("arbitrary",),
            # Big tiles need more than v5e's 16 MiB scoped default; actual
            # demand (~16-28 MiB) stays well inside every generation's VMEM.
            vmem_limit_bytes=64 << 20,
        ),
    )(f2, t2)
    # Single cross-lane/sublane reduction of the 1 KiB partial-sum block.
    return jnp.sum(acc)


@jax.jit
def reconstruction_loss(features, target):
    """Pallas equivalent of ReconstructionLoss.forward(features, target)."""
    assert features.shape == target.shape
    n = features.size
    if n == 0:
        return jnp.array(jnp.nan, jnp.float32)

    # Native dtypes, bitcast flatten (no copy under jit).
    f = features.reshape(-1)
    t = target.reshape(-1)

    rows = n // LANES
    if rows > MAX_TILE_ROWS:
        # Multi-step grid; a non-dividing row count is masked in-kernel.
        k_rows, tile_rows = rows, MAX_TILE_ROWS
    else:
        # Single full-dim block; keep the in-kernel fold exact (multiple of 8)
        # and push the few leftover rows into the jnp tail below.
        k_rows = rows - rows % ACC_ROWS
        tile_rows = k_rows

    split = k_rows * LANES
    total = jnp.float32(0.0)

    if k_rows > 0:
        # When n is lane-aligned (common conv-feature case) this is a pure
        # bitcast view; otherwise only the bulk prefix slice is materialized.
        fb = f if split == n else f[:split]
        tb = t if split == n else t[:split]
        total = _recon_loss_bulk(fb.reshape(k_rows, LANES),
                                 tb.reshape(k_rows, LANES),
                                 k_rows, tile_rows)

    if split < n:
        # Ragged tail (< ACC_ROWS*LANES + LANES elements): plain jnp, negligible.
        ft = f[split:].astype(jnp.float32)
        tt = t[split:].astype(jnp.float32)
        total = total + jnp.sum(jnp.log(jnp.abs(tt - ft) + 0.5))

    return total / jnp.float32(n)


if __name__ == "__main__":
    key = jax.random.PRNGKey(0)
    kf, kt = jax.random.split(key)

    def ref_loss(f, t):
        f32 = f.astype(jnp.float32)
        t32 = t.astype(jnp.float32)
        return jnp.mean(jnp.log(jnp.abs(t32 - f32) + 0.5))

    # 1) Lane-aligned NCHW feature map (zero-copy path, single tile).
    features = jax.random.normal(kf, (2, 4, 16, 16), dtype=jnp.float32)
    target = jax.random.normal(kt, (2, 4, 16, 16), dtype=jnp.float32)
    loss = jax.block_until_ready(reconstruction_loss(features, target))
    ref = ref_loss(features, target)
    assert jnp.allclose(loss, ref, atol=1e-5, rtol=1e-5), (loss, ref)

    # 2) Ragged size (n = 1155): kernel bulk + tiny jnp tail.
    f2 = jax.random.normal(kf, (3, 5, 7, 11), dtype=jnp.float32)
    t2 = jax.random.normal(kt, (3, 5, 7, 11), dtype=jnp.float32)
    loss2 = jax.block_until_ready(reconstruction_loss(f2, t2))
    ref2 = ref_loss(f2, t2)
    assert jnp.allclose(loss2, ref2, atol=1e-5, rtol=1e-5), (loss2, ref2)

    # 3) Mixed precision: bf16 features stream natively (no wrapper upcast).
    f3 = jax.random.normal(kf, (2, 8, 16, 16), dtype=jnp.bfloat16)
    t3 = jax.random.normal(kt, (2, 8, 16, 16), dtype=jnp.float32)
    loss3 = jax.block_until_ready(reconstruction_loss(f3, t3))
    ref3 = ref_loss(f3, t3)
    assert jnp.allclose(loss3, ref3, atol=1e-5, rtol=1e-5), (loss3, ref3)

    # 4) Multi-tile grid with a ragged last block (rows = 10240 > 8192),
    #    exercising the pl.when-masked final step.
    f4 = jax.random.normal(kf, (2, 4, 1280, 128), dtype=jnp.float32)
    t4 = jax.random.normal(kt, (2, 4, 1280, 128), dtype=jnp.float32)
    loss4 = jax.block_until_ready(reconstruction_loss(f4, t4))
    ref4 = ref_loss(f4, t4)
    assert jnp.allclose(loss4, ref4, atol=1e-4, rtol=1e-4), (loss4, ref4)

    print("KERNEL_OK")
</pallas_src>

<mosaic_0001>
module attributes {stable_mosaic.version = 11 : i64} {
  func.func @_recon_loss_kernel(%arg0: i32, %arg1: memref<16x128xf32, #tpu.memory_space<vmem>>, %arg2: memref<16x128xf32, #tpu.memory_space<vmem>>, %arg3: memref<8x128xf32, #tpu.memory_space<vmem>>) attributes {dimension_semantics = [#tpu.dimension_semantics<arbitrary>], iteration_bounds = array<i64: 1>, scalar_prefetch = 0 : i64, scratch_operands = 0 : i64, tpu.core_type = #tpu.core_type<tc>, window_params = [{transform_indices = @transform_0, window_bounds = array<i64: 16, 128>}, {transform_indices = @transform_1, window_bounds = array<i64: 16, 128>}, {pipeline_mode = #tpu.pipeline_mode<synchronous>, transform_indices = @transform_2, window_bounds = array<i64: 8, 128>}]} {
    %c0_i32 = arith.constant 0 : i32
    %0 = arith.cmpi eq, %arg0, %c0_i32 : i32
    %1 = arith.extui %0 : i1 to i32
    %c0_i32_0 = arith.constant 0 : i32
    %2 = arith.cmpi ne, %1, %c0_i32_0 : i32
    scf.if %2 {
      %cst_9 = arith.constant 0.000000e+00 : f32
      %15 = vector.broadcast %cst_9 : f32 to vector<8x128xf32>
      %c0_10 = arith.constant 0 : index
      %c0_11 = arith.constant 0 : index
      %16 = vector.load %arg3[%c0_10, %c0_11] : memref<8x128xf32, #tpu.memory_space<vmem>>, vector<8x128xf32>
      tpu.vector_store %arg3[%c0_10, %c0_11], %15 {strides = array<i32>} : memref<8x128xf32, #tpu.memory_space<vmem>>, vector<8x128xf32>,
    } else {
    }
    %c0 = arith.constant 0 : index
    %c0_1 = arith.constant 0 : index
    %3 = vector.load %arg2[%c0, %c0_1] : memref<16x128xf32, #tpu.memory_space<vmem>>, vector<16x128xf32>
    %c0_2 = arith.constant 0 : index
    %c0_3 = arith.constant 0 : index
    %4 = vector.load %arg1[%c0_2, %c0_3] : memref<16x128xf32, #tpu.memory_space<vmem>>, vector<16x128xf32>
    %5 = arith.subf %3, %4 : vector<16x128xf32>
    %6 = math.absf %5 : vector<16x128xf32>
    %cst = arith.constant 5.000000e-01 : f32
    %7 = vector.broadcast %cst : f32 to vector<16x128xf32>
    %8 = arith.addf %6, %7 : vector<16x128xf32>
    %9 = math.log %8 : vector<16x128xf32>
    %c0_4 = arith.constant 0 : index
    %c0_5 = arith.constant 0 : index
    %10 = vector.load %arg3[%c0_4, %c0_5] : memref<8x128xf32, #tpu.memory_space<vmem>>, vector<8x128xf32>
    %11 = vector.shape_cast %9 : vector<16x128xf32> to vector<2x8x128xf32>
    %cst_6 = arith.constant dense<0.000000e+00> : vector<8x128xf32>
    %12 = vector.multi_reduction <add>, %11, %cst_6 [0] : vector<2x8x128xf32> to vector<8x128xf32>
    %13 = arith.addf %10, %12 : vector<8x128xf32>
    %c0_7 = arith.constant 0 : index
    %c0_8 = arith.constant 0 : index
    %14 = vector.load %arg3[%c0_7, %c0_8] : memref<8x128xf32, #tpu.memory_space<vmem>>, vector<8x128xf32>
    tpu.vector_store %arg3[%c0_7, %c0_8], %13 {strides = array<i32>} : memref<8x128xf32, #tpu.memory_space<vmem>>, vector<8x128xf32>,
    return
  }
  func.func @transform_0(%arg0: i32) -> (i32, i32) {
    %c0_i32 = arith.constant 0 : i32
    %c0_i32_0 = arith.constant 0 : i32
    return %arg0, %c0_i32 : i32, i32
  }
  func.func @transform_1(%arg0: i32) -> (i32, i32) {
    %c0_i32 = arith.constant 0 : i32
    %c0_i32_0 = arith.constant 0 : i32
    return %arg0, %c0_i32 : i32, i32
  }
  func.func @transform_2(%arg0: i32) -> (i32, i32) {
    %c0_i32 = arith.constant 0 : i32
    %c0_i32_0 = arith.constant 0 : i32
    %c0_i32_1 = arith.constant 0 : i32
    return %c0_i32, %c0_i32_0 : i32, i32
  }
}

</mosaic_0001>

<llo_original>
// kernel: reconstruction_loss.1
$region0: #{reconstruction_loss.1}
  #allocation0 [shape = 'u32[]', space=smem, size = 0x4, offset = 0x4, fixed_abs, tag = 'smem constant byte address 0x4 - core index']
  #allocation1 [shape = 'u32[72,128]{1,0:T(1,128)}', space=vmem, size = 0x9000, scoped, tag = 'internal scratch']
  %s0 = inlined_call_operand.vmem [shape: f32[16,128], index: 0, kind: input, shape index: {}]
  %s1 = inlined_call_operand.vmem [shape: f32[16,128], index: 1, kind: input, shape index: {}]
  %s2 = inlined_call_operand.vmem [shape: f32[8,128], index: 2, kind: output, shape index: {}]
  %s3 = sld [smem:[#allocation0]]
  $region22: #{reconstruction_loss.1} parent=0
    _
  %s5 = ssub.s32 1, %s3
  %s6 = scalar_select 0, %s5, %s3
  // Predicated region
  $region2: #{reconstruction_loss.1} parent=0 // pred_check
    _
  $region3: #{reconstruction_loss.1} parent=0 // pred_check_branch
    %8 = sbr.rel (0) target = $region5
  $region4: #{reconstruction_loss.1} parent=0 // pred_region
    _
  $region5: #{reconstruction_loss.1} parent=0 // pred_fallthru
    _
  // Predicated region
  $region6: #{reconstruction_loss.1} parent=0 // pred_check
    _
  $region7: #{reconstruction_loss.1} parent=0 // pred_check_branch
    %10 = sbr.rel (0) target = $region9
  $region8: #{reconstruction_loss.1} parent=0 // pred_region
    _
  $region9: #{reconstruction_loss.1} parent=0 // pred_fallthru
    _
  %p11 = scmp.eq.s32.totalorder 0, 0
  // Predicated region
  $region10: #{reconstruction_loss.1} parent=0 // pred_check
    %p12 = pneg %p11
  $region11: #{reconstruction_loss.1} parent=0 // pred_check_branch
    %14 = sbr.rel (%p12) target = $region13
  $region12: #{reconstruction_loss.1} parent=0 // pred_region
    %15 = vst [vmem:[%s2] sm:$0xff] 0.0
  $region13: #{reconstruction_loss.1} parent=0 // pred_fallthru
    _
  %v16 = vld [vmem:[%s1] sm:$0xff]
  %v17 = vld [vmem:[%s1 + $0x8] sm:$0xff]
  %v18 = vld [vmem:[%s0] sm:$0xff]
  %v19 = vld [vmem:[%s0 + $0x8] sm:$0xff]
  %v20 = vsub.f32 %v16, %v18
  %v21 = vsub.f32 %v17, %v19
  %v22 = vand.u32 2147483647, %v20
  %v23 = vand.u32 2147483647, %v21
  %v24 = vadd.f32 %v22, 0.5
  %v25 = vadd.f32 %v23, 0.5
  %v26 = vlog2.pop %v24
  %v27 = vmul.f32 %v26, 0.6931472
  %v28 = vlog2.pop %v25
  %v29 = vmul.f32 %v28, 0.6931472
  %v30 = vld [vmem:[%s2] sm:$0xff]
  %v31 = vadd.f32 %v27, %v29
  %v32 = vadd.f32 %v30, %v31
  %33 = vst [vmem:[%s2] sm:$0xff] %v32
  // Predicated region
  $region14: #{reconstruction_loss.1} parent=0 // pred_check
    _
  $region15: #{reconstruction_loss.1} parent=0 // pred_check_branch
    %35 = sbr.rel (0) target = $region17
  $region16: #{reconstruction_loss.1} parent=0 // pred_region
    _
  $region17: #{reconstruction_loss.1} parent=0 // pred_fallthru
    _
  // Predicated region
  $region18: #{reconstruction_loss.1} parent=0 // pred_check
    _
  $region19: #{reconstruction_loss.1} parent=0 // pred_check_branch
    %37 = sbr.rel (0) target = $region21
  $region20: #{reconstruction_loss.1} parent=0 // pred_region
    _
  $region21: #{reconstruction_loss.1} parent=0 // pred_fallthru
    _

</llo_original>
